<compile_context>
chip_gen: v7x
topology: tpu7x:2x2x1
jax: 0.10.0
libtpu: 0.0.40
codegen_flags: <defaults>
</compile_context>

<pallas_src>
import jax
import jax.numpy as jnp
from jax.experimental import pallas as pl
from jax.experimental.pallas import tpu as pltpu


def _round_up(x, m):
    return ((x + m - 1) // m) * m


def _label_embedder_kernel(eff_ref, table_ref, out_ref):
    """Vectorized embedding-row gather for one (tb, H) output tile.

    eff_ref:   VMEM (tb, 1) int32 — effective (post-token-drop) label per row.
    table_ref: VMEM (C, H)        — whole embedding table, grid-resident,
                                    single-buffered (block index is constant).
    out_ref:   VMEM (tb, H)       — dense, lane-aligned output tile.
    """
    tb = out_ref.shape[0]
    num_rows = table_ref.shape[0]
    # One-hot (tb, C): VPU compare of a class iota against the label column.
    classes = jax.lax.broadcasted_iota(jnp.int32, (tb, num_rows), dimension=1)
    onehot = (classes == eff_ref[...]).astype(table_ref.dtype)
    # Gather == one-hot matmul on the MXU; one dense full-tile store.
    # NOTE: for f32 tables the MXU uses bf16 passes, so this is a very close
    # but not guaranteed bit-exact row copy (tolerance noted in __main__).
    gathered = jnp.dot(onehot, table_ref[...],
                       preferred_element_type=jnp.float32)
    out_ref[...] = gathered.astype(out_ref.dtype)


def _draw_drop_ids(rng_key, batch, dropout_prob):
    """torch.rand(B) < p, with an explicit JAX key."""
    return jax.random.uniform(rng_key, (batch,), jnp.float32) < dropout_prob


def label_embedder_forward(labels, embedding_table, *, num_classes,
                           dropout_prob=0.0, train=False, force_drop_ids=None,
                           rng_key=None, block_b=256):
    """Pallas LabelEmbedder.forward.

    labels: (B,) int   embedding_table: (num_classes + use_cfg, H)
    Returns (B, H).
    """
    B = labels.shape[0]
    C, H = embedding_table.shape
    labels = labels.astype(jnp.int32)
    itemsize = embedding_table.dtype.itemsize

    # ---- token_drop (classifier-free guidance) -> effective labels --------
    can_drop = (train and dropout_prob > 0) or (force_drop_ids is not None)
    if can_drop and C < num_classes + 1:
        raise ValueError(
            "label drops can occur but the embedding table has no CFG null "
            f"row at index {num_classes} (table has {C} rows)")
    if can_drop:
        if force_drop_ids is not None:
            drop_ids = force_drop_ids == 1
        else:
            if rng_key is None:
                raise ValueError(
                    "rng_key is required when train=True and dropout_prob>0")
            drop_ids = _draw_drop_ids(rng_key, B, dropout_prob)
        eff = jnp.where(drop_ids, jnp.int32(num_classes), labels)
    else:
        eff = labels

    # ---- dtype-aware batch tiling ------------------------------------------
    # Native sublane tile: 8 rows (f32), 16 (bf16), 32 (int8/fp8).
    sublane = {4: 8, 2: 16, 1: 32}.get(itemsize, 8)
    tb = min(_round_up(B, sublane), _round_up(block_b, sublane))
    tb = max(tb, sublane)
    b_pad = _round_up(B, tb)
    steps = b_pad // tb

    if b_pad != B:
        # Tail rows gather table row 0 and are sliced off below; this path is
        # skipped whenever B is already a multiple of the native tile.
        eff = jnp.pad(eff, (0, b_pad - B))
    eff2d = eff.reshape(b_pad, 1)

    # ---- VMEM budget: table (single buffer) + double-buffered out/eff ------
    table_bytes = C * H * itemsize
    out_bytes = 2 * tb * H * itemsize
    eff_bytes = 2 * tb * 128 * 4            # (tb, 1) int32 pads lanes to 128
    vmem_limit = max(table_bytes + out_bytes + eff_bytes + (8 << 20), 16 << 20)
    vmem_limit = min(vmem_limit, 100 << 20)
    # TODO(synk): for tables too large to sit in VMEM (notably v7x's 64 MiB/TC),
    # switch to an HBM row-gather variant (scalar-prefetched eff labels +
    # pl.Element row index_map) instead of keeping the whole table resident.

    compiler_params = pltpu.CompilerParams(
        dimension_semantics=("parallel",) if steps > 1 else ("arbitrary",),
        vmem_limit_bytes=int(vmem_limit),
    )
    cost = pl.CostEstimate(
        flops=2 * b_pad * C * H,
        transcendentals=0,
        bytes_accessed=table_bytes + b_pad * H * itemsize + b_pad * 4,
    )

    def _make_call(table_pipeline_mode):
        spec_kwargs = {}
        if table_pipeline_mode is not None:
            spec_kwargs["pipeline_mode"] = table_pipeline_mode
        return pl.pallas_call(
            _label_embedder_kernel,
            out_shape=jax.ShapeDtypeStruct((b_pad, H), embedding_table.dtype),
            grid=(steps,),
            in_specs=[
                pl.BlockSpec((tb, 1), lambda i: (i, 0)),
                # Whole table, constant block index -> stays VMEM-resident.
                pl.BlockSpec((C, H), lambda i: (0, 0), **spec_kwargs),
            ],
            out_specs=pl.BlockSpec((tb, H), lambda i: (i, 0)),
            compiler_params=compiler_params,
            cost_estimate=cost,
        )

    try:
        # Constant block index -> a second table buffer is pure VMEM waste.
        out = _make_call(pl.Buffered(1))(eff2d, embedding_table)
    except Exception:
        # Graceful fallback if this JAX build rejects buffer_count=1.
        out = _make_call(None)(eff2d, embedding_table)

    return out if b_pad == B else out[:B]


# ----------------------------- reference / checks ---------------------------

def _reference(labels, table, num_classes, drop_ids):
    eff = jnp.where(drop_ids, num_classes, labels)
    return table[eff], eff


def _nearest_rows(out, table):
    d = jnp.sum((out[:, None, :] - table[None, :, :]) ** 2, axis=-1)
    return jnp.argmin(d, axis=-1)


if __name__ == "__main__":
    num_classes = 10
    hidden_size = 128        # lane-dense (multiple of 128)
    dropout_prob = 0.1       # > 0 => CFG null row at index num_classes
    B = 8

    key = jax.random.PRNGKey(0)
    k_tab, k_lab, k_drop = jax.random.split(key, 3)

    use_cfg = int(dropout_prob > 0)
    table = 0.02 * jax.random.normal(
        k_tab, (num_classes + use_cfg, hidden_size), jnp.float32)
    labels = jax.random.randint(k_lab, (B,), 0, num_classes, dtype=jnp.int32)

    # The one-hot MXU gather may round through bf16 passes for f32 tables:
    # tight tolerance plus an exact "which row was picked" identity check.
    atol = 2e-3

    # 1) Eval path (train=False, no force_drop): plain embedding lookup.
    out_eval = jax.block_until_ready(label_embedder_forward(
        labels, table, num_classes=num_classes,
        dropout_prob=dropout_prob, train=False))
    ref_eval, eff_eval = _reference(labels, table, num_classes,
                                    jnp.zeros((B,), bool))
    assert out_eval.shape == (B, hidden_size)
    assert bool(jnp.allclose(out_eval, ref_eval, rtol=0, atol=atol)), \
        "eval path value mismatch"
    assert bool(jnp.array_equal(_nearest_rows(out_eval, table), eff_eval)), \
        "eval path picked wrong rows"

    # 2) Deterministic token_drop via force_drop_ids.
    force_drop_ids = jnp.array([1, 0, 1, 0, 0, 0, 1, 0], jnp.int32)
    out_drop = jax.block_until_ready(label_embedder_forward(
        labels, table, num_classes=num_classes,
        dropout_prob=dropout_prob, train=True, force_drop_ids=force_drop_ids))
    ref_drop, eff_drop = _reference(labels, table, num_classes,
                                    force_drop_ids == 1)
    assert bool(jnp.allclose(out_drop, ref_drop, rtol=0, atol=atol)), \
        "force_drop path value mismatch"
    assert bool(jnp.array_equal(_nearest_rows(out_drop, table), eff_drop)), \
        "force_drop path picked wrong rows"

    # 3) Training path with random CFG dropout (deterministic jax.random key);
    #    replicate the wrapper's draw to build the exact reference.
    out_rand = jax.block_until_ready(label_embedder_forward(
        labels, table, num_classes=num_classes,
        dropout_prob=dropout_prob, train=True, rng_key=k_drop))
    drop_rand = _draw_drop_ids(k_drop, B, dropout_prob)
    ref_rand, eff_rand = _reference(labels, table, num_classes, drop_rand)
    assert bool(jnp.allclose(out_rand, ref_rand, rtol=0, atol=atol)), \
        "random-drop path value mismatch"
    assert bool(jnp.array_equal(_nearest_rows(out_rand, table), eff_rand)), \
        "random-drop path picked wrong rows"

    print("KERNEL_OK")
</pallas_src>

<mosaic_0001>
module attributes {stable_mosaic.version = 11 : i64} {
  func.func @_label_embedder_kernel(%arg0: i32, %arg1: memref<8x1xi32, #tpu.memory_space<vmem>>, %arg2: memref<11x128xf32, #tpu.memory_space<vmem>>, %arg3: memref<8x128xf32, #tpu.memory_space<vmem>>) attributes {dimension_semantics = [#tpu.dimension_semantics<arbitrary>], iteration_bounds = array<i64: 1>, scalar_prefetch = 0 : i64, scratch_operands = 0 : i64, tpu.core_type = #tpu.core_type<tc>, window_params = [{transform_indices = @transform_0, window_bounds = array<i64: 8, 1>}, {pipeline_mode = #tpu.pipeline_mode<synchronous>, transform_indices = @transform_1, window_bounds = array<i64: 11, 128>}, {transform_indices = @transform_2, window_bounds = array<i64: 8, 128>}]} {
    %0 = tpu.iota {dimensions = array<i32: 1>} : vector<8x11xi32>
    %c0 = arith.constant 0 : index
    %c0_0 = arith.constant 0 : index
    %1 = vector.load %arg1[%c0, %c0_0] : memref<8x1xi32, #tpu.memory_space<vmem>>, vector<8x1xi32>
    %2 = vector.broadcast %1 : vector<8x1xi32> to vector<8x11xi32>
    %3 = arith.cmpi eq, %0, %2 : vector<8x11xi32>
    %4 = arith.extui %3 : vector<8x11xi1> to vector<8x11xi32>
    %5 = arith.sitofp %4 : vector<8x11xi32> to vector<8x11xf32>
    %c0_1 = arith.constant 0 : index
    %c0_2 = arith.constant 0 : index
    %6 = vector.load %arg2[%c0_1, %c0_2] : memref<11x128xf32, #tpu.memory_space<vmem>>, vector<11x128xf32>
    %cst = arith.constant dense<0.000000e+00> : vector<8x128xf32>
    %7 = tpu.matmul %5, %6, %cst {dimension_numbers = #tpu.dot_dimension_numbers<[1], [0], [0], [1], [0, 0, 1, 1], [], []>} : vector<8x11xf32>, vector<11x128xf32>, vector<8x128xf32> -> vector<8x128xf32>
    %c0_3 = arith.constant 0 : index
    %c0_4 = arith.constant 0 : index
    %8 = vector.load %arg3[%c0_3, %c0_4] : memref<8x128xf32, #tpu.memory_space<vmem>>, vector<8x128xf32>
    tpu.vector_store %arg3[%c0_3, %c0_4], %7 {strides = array<i32>} : memref<8x128xf32, #tpu.memory_space<vmem>>, vector<8x128xf32>,
    return
  }
  func.func @transform_0(%arg0: i32) -> (i32, i32) {
    %c0_i32 = arith.constant 0 : i32
    %c0_i32_0 = arith.constant 0 : i32
    return %arg0, %c0_i32 : i32, i32
  }
  func.func @transform_1(%arg0: i32) -> (i32, i32) {
    %c0_i32 = arith.constant 0 : i32
    %c0_i32_0 = arith.constant 0 : i32
    %c0_i32_1 = arith.constant 0 : i32
    return %c0_i32, %c0_i32_0 : i32, i32
  }
  func.func @transform_2(%arg0: i32) -> (i32, i32) {
    %c0_i32 = arith.constant 0 : i32
    %c0_i32_0 = arith.constant 0 : i32
    return %arg0, %c0_i32 : i32, i32
  }
}

module attributes {stable_mosaic.version = 11 : i64} {
  func.func @_label_embedder_kernel(%arg0: i32, %arg1: memref<8x1xi32, #tpu.memory_space<vmem>>, %arg2: memref<11x128xf32, #tpu.memory_space<vmem>>, %arg3: memref<8x128xf32, #tpu.memory_space<vmem>>) attributes {dimension_semantics = [#tpu.dimension_semantics<arbitrary>], iteration_bounds = array<i64: 1>, scalar_prefetch = 0 : i64, scratch_operands = 0 : i64, tpu.core_type = #tpu.core_type<tc>, window_params = [{transform_indices = @transform_0, window_bounds = array<i64: 8, 1>}, {pipeline_mode = #tpu.pipeline_mode<synchronous>, transform_indices = @transform_1, window_bounds = array<i64: 11, 128>}, {transform_indices = @transform_2, window_bounds = array<i64: 8, 128>}]} {
    %0 = tpu.iota {dimensions = array<i32: 1>} : vector<8x11xi32>
    %c0 = arith.constant 0 : index
    %c0_0 = arith.constant 0 : index
    %1 = vector.load %arg1[%c0, %c0_0] : memref<8x1xi32, #tpu.memory_space<vmem>>, vector<8x1xi32>
    %2 = vector.broadcast %1 : vector<8x1xi32> to vector<8x11xi32>
    %3 = arith.cmpi eq, %0, %2 : vector<8x11xi32>
    %4 = arith.extui %3 : vector<8x11xi1> to vector<8x11xi32>
    %5 = arith.sitofp %4 : vector<8x11xi32> to vector<8x11xf32>
    %c0_1 = arith.constant 0 : index
    %c0_2 = arith.constant 0 : index
    %6 = vector.load %arg2[%c0_1, %c0_2] : memref<11x128xf32, #tpu.memory_space<vmem>>, vector<11x128xf32>
    %cst = arith.constant dense<0.000000e+00> : vector<8x128xf32>
    %7 = tpu.matmul %5, %6, %cst {dimension_numbers = #tpu.dot_dimension_numbers<[1], [0], [0], [1], [0, 0, 1, 1], [], []>} : vector<8x11xf32>, vector<11x128xf32>, vector<8x128xf32> -> vector<8x128xf32>
    %c0_3 = arith.constant 0 : index
    %c0_4 = arith.constant 0 : index
    %8 = vector.load %arg3[%c0_3, %c0_4] : memref<8x128xf32, #tpu.memory_space<vmem>>, vector<8x128xf32>
    tpu.vector_store %arg3[%c0_3, %c0_4], %7 {strides = array<i32>} : memref<8x128xf32, #tpu.memory_space<vmem>>, vector<8x128xf32>,
    return
  }
  func.func @transform_0(%arg0: i32) -> (i32, i32) {
    %c0_i32 = arith.constant 0 : i32
    %c0_i32_0 = arith.constant 0 : i32
    return %arg0, %c0_i32 : i32, i32
  }
  func.func @transform_1(%arg0: i32) -> (i32, i32) {
    %c0_i32 = arith.constant 0 : i32
    %c0_i32_0 = arith.constant 0 : i32
    %c0_i32_1 = arith.constant 0 : i32
    return %c0_i32, %c0_i32_0 : i32, i32
  }
  func.func @transform_2(%arg0: i32) -> (i32, i32) {
    %c0_i32 = arith.constant 0 : i32
    %c0_i32_0 = arith.constant 0 : i32
    return %arg0, %c0_i32 : i32, i32
  }
}

</mosaic_0001>

<llo_original>
// kernel: tpu_custom_call.1
$region0: #{tpu_custom_call.1}
  #allocation0 [shape = 'u32[]', space=smem, size = 0x4, offset = 0x4, fixed_abs, tag = 'smem constant byte address 0x4 - core index']
  #allocation1 [shape = 'u32[144,128]{1,0:T(1,128)}', space=vmem, size = 0x12000, scoped, tag = 'internal scratch']
  %s0 = inlined_call_operand.vmem [shape: s32[8,1], index: 0, kind: input, shape index: {}]
  %s1 = inlined_call_operand.hbm [shape: f32[11,128], index: 1, kind: input, shape index: {}]
  %s2 = inlined_call_operand.hbm [shape: f32[8,128], index: 2, kind: output, shape index: {}]
  %s3 = sld [smem:[#allocation0]]
  $region22: #{tpu_custom_call.1} parent=0
    _
  %s5 = ssub.s32 1, %s3
  %s6 = scalar_select 0, %s5, %s3
  $region1: #{tpu_custom_call.1} parent=0
    #allocation2 [shape = 'u8[8192]{0}', space=vmem, size = 0x2000, scoped, tag = 'input window, operand 1, single buffered']
    #allocation3 [shape = 's32[1]{0}', space=sflag, size = 0x4, scoped, tag = 'scoped memory for tpu_custom_call.1']
    #allocation4 [shape = 's32[1]{0}', space=sflag, size = 0x4, scoped, tag = 'scoped memory for tpu_custom_call.1']
    #allocation5 [shape = 'u8[4096]{0}', space=vmem, size = 0x1000, scoped, tag = 'output window, operand 0, single buffered']
    %7 = vsyncpa [#allocation3], 0
    %8 = vsyncpa [#allocation4], 0
    // Predicated region
    $region2: #{tpu_custom_call.1} parent=1 // pred_check
      _
    $region3: #{tpu_custom_call.1} parent=1 // pred_check_branch
      %10 = sbr.rel (0) target = $region5
    $region4: #{tpu_custom_call.1} parent=1 // pred_region
      _
    $region5: #{tpu_custom_call.1} parent=1 // pred_fallthru
      _
    // Predicated region
    $region6: #{tpu_custom_call.1} parent=1 // pred_check
      _
    $region7: #{tpu_custom_call.1} parent=1 // pred_check_branch
      %12 = sbr.rel (0) target = $region9
    $region8: #{tpu_custom_call.1} parent=1 // pred_region
      %s14 = ssub.s32 256, 256
      %15 = vsyncadd [#allocation3], %s14
      %s16 = sshll.u32 [#allocation2], 4
      %s17 = int_to_ptr.vmem [resolvable:$true] %s16
      %22 = dma.hbm_to_vmem [thread:$0]  %s1, 256, %s17, [#allocation3], 128, 128, 8
    $region9: #{tpu_custom_call.1} parent=1 // pred_fallthru
      _
    // Predicated region
    $region10: #{tpu_custom_call.1} parent=1 // pred_check
      _
    $region11: #{tpu_custom_call.1} parent=1 // pred_check_branch
      %24 = sbr.rel (0) target = $region13
    $region12: #{tpu_custom_call.1} parent=1 // pred_region
      %25 = dma.done [#allocation3], 256
    $region13: #{tpu_custom_call.1} parent=1 // pred_fallthru
      _
    %v26 = vlaneseq
    %v27 = vand.u32 %v26, 127
    %v28 = vld [vmem:[%s0] sm:$0xff]
    %29 = vset.pattern.permute.xlu0 0
    %30 = vperm.xlu0 %29, %v28
    %v31 = vpop.permute.xlu0 %30
    %vm32 = vcmp.eq.s32.totalorder %v27, %v31
    %v33 = vsel %vm32, 1, 0
    %v34 = vcvt.s32.f32 %v33
    %v35 = vld [vmem:[#allocation2] sm:$0xff]
    %v36 = vld [vmem:[#allocation2 + $0x8] sm:$0x7]
    %vm37 = vcmask 89088
    %v39 = vsel %vm37, %v34, 0
    %vm41 = vcmask 1042432
    %v43 = vsel %vm41, %v36, 0
    %45 = vmatprep.subr.mxu0 0.0
    %46 = vmatpush1.msra.mxu0 %v35
    %47 = vmatprep.subr.mxu0 0.0
    %48 = vmatpush1.msra.mxu0 %v43
    %49 = vmatprep.subr.mxu0 0.0
    %50 = vmatpush1.msra.mxu0 0.0
    %51 = vmatprep.subr.mxu0 0.0
    %52 = vmatpush1.msra.mxu0 0.0
    %53 = vmatprep.subr.mxu0 0.0
    %54 = vmatpush1.msra.mxu0 0.0
    %55 = vmatprep.subr.mxu0 0.0
    %56 = vmatpush1.msra.mxu0 0.0
    %57 = vmatprep.subr.mxu0 0.0
    %58 = vmatpush1.msra.mxu0 0.0
    %59 = vmatprep.subr.mxu0 0.0
    %60 = vmatpush1.msra.mxu0 0.0
    %61 = vmatprep.subr.mxu0 0.0
    %62 = vmatpush1.msra.mxu0 0.0
    %63 = vmatprep.subr.mxu0 0.0
    %64 = vmatpush1.msra.mxu0 0.0
    %65 = vmatprep.subr.mxu0 0.0
    %66 = vmatpush1.msra.mxu0 0.0
    %67 = vmatprep.subr.mxu0 0.0
    %68 = vmatpush1.msra.mxu0 0.0
    %69 = vmatprep.subr.mxu0 0.0
    %70 = vmatpush1.msra.mxu0 0.0
    %71 = vmatprep.subr.mxu0 0.0
    %72 = vmatpush1.msra.mxu0 0.0
    %73 = vmatprep.subr.mxu0 0.0
    %74 = vmatpush1.msra.mxu0 0.0
    %75 = vmatprep.subr.mxu0 0.0
    %76 = vmatpush1.msra.mxu0 0.0
    %77 = vmatprep.subr.mxu0 0.0
    %78 = vmatpush1.msra.mxu0 0.0
    %79 = vmatprep.subr.mxu0 0.0
    %80 = vmatpush1.msra.mxu0 0.0
    %81 = vmatprep.subr.mxu0 0.0
    %82 = vmatpush1.msra.mxu0 0.0
    %83 = vmatprep.subr.mxu0 0.0
    %84 = vmatpush1.msra.mxu0 0.0
    %85 = vmatprep.subr.mxu0 0.0
    %86 = vmatpush1.msra.mxu0 0.0
    %87 = vmatprep.subr.mxu0 0.0
    %88 = vmatpush1.msra.mxu0 0.0
    %89 = vmatprep.subr.mxu0 0.0
    %90 = vmatpush1.msra.mxu0 0.0
    %91 = vmatprep.subr.mxu0 0.0
    %92 = vmatpush1.msra.mxu0 0.0
    %93 = vmatprep.subr.mxu0 0.0
    %94 = vmatpush1.msra.mxu0 0.0
    %95 = vmatprep.subr.mxu0 0.0
    %96 = vmatpush1.msra.mxu0 0.0
    %97 = vmatprep.subr.mxu0 0.0
    %98 = vmatpush1.msra.mxu0 0.0
    %99 = vmatprep.subr.mxu0 0.0
    %100 = vmatpush1.msra.mxu0 0.0
    %101 = vmatprep.subr.mxu0 0.0
    %102 = vmatpush1.msra.mxu0 0.0
    %103 = vmatprep.subr.mxu0 0.0
    %104 = vmatpush1.msra.mxu0 0.0
    %105 = vmatprep.subr.mxu0 0.0
    %106 = vmatpush1.msra.mxu0 0.0
    %107 = vmatprep.subr.mxu0 0.0
    %108 = vmatpush1.msra.mxu0 0.0
    %109 = vmatprep.mubr.f32.mxu0 0.0
    %110 = vmatmul.mubr.f32.gmra.mrb[0].mxu0 %v39
    %v111 = vpop.f32.mrb[0].mxu0
    %v112 = vadd.f32 0.0, %v111
    %v113 = vpop.f32.mrb[0].mxu0
    %114 = vdwg.mxu0
    %115 = vst [vmem:[#allocation5] sm:$0xff] %v112
    // Predicated region
    $region14: #{tpu_custom_call.1} parent=1 // pred_check
      _
    $region15: #{tpu_custom_call.1} parent=1 // pred_check_branch
      %117 = sbr.rel (0) target = $region17
    $region16: #{tpu_custom_call.1} parent=1 // pred_region
      %s119 = ssub.s32 128, 128
      %120 = vsyncadd [#allocation4], %s119
      %s122 = sshll.u32 [#allocation5], 4
      %s123 = int_to_ptr.vmem [resolvable:$true] %s122
      %125 = dma.vmem_to_hbm [thread:$0]  %s123, 128, %s2, [#allocation4]
    $region17: #{tpu_custom_call.1} parent=1 // pred_fallthru
      _
    // Predicated region
    $region18: #{tpu_custom_call.1} parent=1 // pred_check
      _
    $region19: #{tpu_custom_call.1} parent=1 // pred_check_branch
      %127 = sbr.rel (0) target = $region21
    $region20: #{tpu_custom_call.1} parent=1 // pred_region
      %128 = dma.done [#allocation4], 128
    $region21: #{tpu_custom_call.1} parent=1 // pred_fallthru
      _
    %129 = vsyncpa [#allocation3], 1
    %130 = vsyncpa [#allocation4], 1

// kernel: tpu_custom_call.1
$region0: #{tpu_custom_call.1}
  #allocation0 [shape = 'u32[]', space=smem, size = 0x4, offset = 0x4, fixed_abs, tag = 'smem constant byte address 0x4 - core index']
  #allocation1 [shape = 'u32[144,128]{1,0:T(1,128)}', space=vmem, size = 0x12000, scoped, tag = 'internal scratch']
  %s0 = inlined_call_operand.vmem [shape: s32[8,1], index: 0, kind: input, shape index: {}]
  %s1 = inlined_call_operand.hbm [shape: f32[11,128], index: 1, kind: input, shape index: {}]
  %s2 = inlined_call_operand.hbm [shape: f32[8,128], index: 2, kind: output, shape index: {}]
  %s3 = sld [smem:[#allocation0]]
  $region22: #{tpu_custom_call.1} parent=0
    _
  %s5 = ssub.s32 1, %s3
  %s6 = scalar_select 0, %s5, %s3
  $region1: #{tpu_custom_call.1} parent=0
    #allocation2 [shape = 'u8[8192]{0}', space=vmem, size = 0x2000, scoped, tag = 'input window, operand 1, single buffered']
    #allocation3 [shape = 's32[1]{0}', space=sflag, size = 0x4, scoped, tag = 'scoped memory for tpu_custom_call.1']
    #allocation4 [shape = 's32[1]{0}', space=sflag, size = 0x4, scoped, tag = 'scoped memory for tpu_custom_call.1']
    #allocation5 [shape = 'u8[4096]{0}', space=vmem, size = 0x1000, scoped, tag = 'output window, operand 0, single buffered']
    %7 = vsyncpa [#allocation3], 0
    %8 = vsyncpa [#allocation4], 0
    // Predicated region
    $region2: #{tpu_custom_call.1} parent=1 // pred_check
      _
    $region3: #{tpu_custom_call.1} parent=1 // pred_check_branch
      %10 = sbr.rel (0) target = $region5
    $region4: #{tpu_custom_call.1} parent=1 // pred_region
      _
    $region5: #{tpu_custom_call.1} parent=1 // pred_fallthru
      _
    // Predicated region
    $region6: #{tpu_custom_call.1} parent=1 // pred_check
      _
    $region7: #{tpu_custom_call.1} parent=1 // pred_check_branch
      %12 = sbr.rel (0) target = $region9
    $region8: #{tpu_custom_call.1} parent=1 // pred_region
      %s14 = ssub.s32 256, 256
      %15 = vsyncadd [#allocation3], %s14
      %s16 = sshll.u32 [#allocation2], 4
      %s17 = int_to_ptr.vmem [resolvable:$true] %s16
      %22 = dma.hbm_to_vmem [thread:$0]  %s1, 256, %s17, [#allocation3], 128, 128, 8
    $region9: #{tpu_custom_call.1} parent=1 // pred_fallthru
      _
    // Predicated region
    $region10: #{tpu_custom_call.1} parent=1 // pred_check
      _
    $region11: #{tpu_custom_call.1} parent=1 // pred_check_branch
      %24 = sbr.rel (0) target = $region13
    $region12: #{tpu_custom_call.1} parent=1 // pred_region
      %25 = dma.done [#allocation3], 256
    $region13: #{tpu_custom_call.1} parent=1 // pred_fallthru
      _
    %v26 = vlaneseq
    %v27 = vand.u32 %v26, 127
    %v28 = vld [vmem:[%s0] sm:$0xff]
    %29 = vset.pattern.permute.xlu0 0
    %30 = vperm.xlu0 %29, %v28
    %v31 = vpop.permute.xlu0 %30
    %vm32 = vcmp.eq.s32.totalorder %v27, %v31
    %v33 = vsel %vm32, 1, 0
    %v34 = vcvt.s32.f32 %v33
    %v35 = vld [vmem:[#allocation2] sm:$0xff]
    %v36 = vld [vmem:[#allocation2 + $0x8] sm:$0x7]
    %vm37 = vcmask 89088
    %v39 = vsel %vm37, %v34, 0
    %vm41 = vcmask 1042432
    %v43 = vsel %vm41, %v36, 0
    %45 = vmatprep.subr.mxu0 0.0
    %46 = vmatpush1.msra.mxu0 %v35
    %47 = vmatprep.subr.mxu0 0.0
    %48 = vmatpush1.msra.mxu0 %v43
    %49 = vmatprep.subr.mxu0 0.0
    %50 = vmatpush1.msra.mxu0 0.0
    %51 = vmatprep.subr.mxu0 0.0
    %52 = vmatpush1.msra.mxu0 0.0
    %53 = vmatprep.subr.mxu0 0.0
    %54 = vmatpush1.msra.mxu0 0.0
    %55 = vmatprep.subr.mxu0 0.0
    %56 = vmatpush1.msra.mxu0 0.0
    %57 = vmatprep.subr.mxu0 0.0
    %58 = vmatpush1.msra.mxu0 0.0
    %59 = vmatprep.subr.mxu0 0.0
    %60 = vmatpush1.msra.mxu0 0.0
    %61 = vmatprep.subr.mxu0 0.0
    %62 = vmatpush1.msra.mxu0 0.0
    %63 = vmatprep.subr.mxu0 0.0
    %64 = vmatpush1.msra.mxu0 0.0
    %65 = vmatprep.subr.mxu0 0.0
    %66 = vmatpush1.msra.mxu0 0.0
    %67 = vmatprep.subr.mxu0 0.0
    %68 = vmatpush1.msra.mxu0 0.0
    %69 = vmatprep.subr.mxu0 0.0
    %70 = vmatpush1.msra.mxu0 0.0
    %71 = vmatprep.subr.mxu0 0.0
    %72 = vmatpush1.msra.mxu0 0.0
    %73 = vmatprep.subr.mxu0 0.0
    %74 = vmatpush1.msra.mxu0 0.0
    %75 = vmatprep.subr.mxu0 0.0
    %76 = vmatpush1.msra.mxu0 0.0
    %77 = vmatprep.subr.mxu0 0.0
    %78 = vmatpush1.msra.mxu0 0.0
    %79 = vmatprep.subr.mxu0 0.0
    %80 = vmatpush1.msra.mxu0 0.0
    %81 = vmatprep.subr.mxu0 0.0
    %82 = vmatpush1.msra.mxu0 0.0
    %83 = vmatprep.subr.mxu0 0.0
    %84 = vmatpush1.msra.mxu0 0.0
    %85 = vmatprep.subr.mxu0 0.0
    %86 = vmatpush1.msra.mxu0 0.0
    %87 = vmatprep.subr.mxu0 0.0
    %88 = vmatpush1.msra.mxu0 0.0
    %89 = vmatprep.subr.mxu0 0.0
    %90 = vmatpush1.msra.mxu0 0.0
    %91 = vmatprep.subr.mxu0 0.0
    %92 = vmatpush1.msra.mxu0 0.0
    %93 = vmatprep.subr.mxu0 0.0
    %94 = vmatpush1.msra.mxu0 0.0
    %95 = vmatprep.subr.mxu0 0.0
    %96 = vmatpush1.msra.mxu0 0.0
    %97 = vmatprep.subr.mxu0 0.0
    %98 = vmatpush1.msra.mxu0 0.0
    %99 = vmatprep.subr.mxu0 0.0
    %100 = vmatpush1.msra.mxu0 0.0
    %101 = vmatprep.subr.mxu0 0.0
    %102 = vmatpush1.msra.mxu0 0.0
    %103 = vmatprep.subr.mxu0 0.0
    %104 = vmatpush1.msra.mxu0 0.0
    %105 = vmatprep.subr.mxu0 0.0
    %106 = vmatpush1.msra.mxu0 0.0
    %107 = vmatprep.subr.mxu0 0.0
    %108 = vmatpush1.msra.mxu0 0.0
    %109 = vmatprep.mubr.f32.mxu0 0.0
    %110 = vmatmul.mubr.f32.gmra.mrb[0].mxu0 %v39
    %v111 = vpop.f32.mrb[0].mxu0
    %v112 = vadd.f32 0.0, %v111
    %v113 = vpop.f32.mrb[0].mxu0
    %114 = vdwg.mxu0
    %115 = vst [vmem:[#allocation5] sm:$0xff] %v112
    // Predicated region
    $region14: #{tpu_custom_call.1} parent=1 // pred_check
      _
    $region15: #{tpu_custom_call.1} parent=1 // pred_check_branch
      %117 = sbr.rel (0) target = $region17
    $region16: #{tpu_custom_call.1} parent=1 // pred_region
      %s119 = ssub.s32 128, 128
      %120 = vsyncadd [#allocation4], %s119
      %s122 = sshll.u32 [#allocation5], 4
      %s123 = int_to_ptr.vmem [resolvable:$true] %s122
      %125 = dma.vmem_to_hbm [thread:$0]  %s123, 128, %s2, [#allocation4]
    $region17: #{tpu_custom_call.1} parent=1 // pred_fallthru
      _
    // Predicated region
    $region18: #{tpu_custom_call.1} parent=1 // pred_check
      _
    $region19: #{tpu_custom_call.1} parent=1 // pred_check_branch
      %127 = sbr.rel (0) target = $region21
    $region20: #{tpu_custom_call.1} parent=1 // pred_region
      %128 = dma.done [#allocation4], 128
    $region21: #{tpu_custom_call.1} parent=1 // pred_fallthru
      _
    %129 = vsyncpa [#allocation3], 1
    %130 = vsyncpa [#allocation4], 1

</llo_original>
